<compile_context>
chip_gen: v7x
topology: tpu7x:2x2x1
jax: 0.10.0
libtpu: 0.0.40
codegen_flags: <defaults>
</compile_context>

<pallas_src>
import jax
import jax.numpy as jnp
from jax.experimental import pallas as pl
from jax.experimental.pallas import tpu as pltpu


def _vmem_capacity_bytes():
    try:
        return int(pltpu.get_tpu_info().vmem_capacity_bytes)
    except Exception:
        return 64 << 20  # conservative fallback (v7x per-TC VMEM)


def _pick_blocks(G, N, H, x_itemsize, w_itemsize, vmem_budget,
                 graph_block=None, node_chunk=None):
    """Choose (Gb, Nc): graph block and node chunk sizes."""
    # Graph block: multiple of 8 (or the full G), sized so the "parallel"
    # grid axis has >=2 (ideally >=4) steps for megacore sharding.
    if graph_block is not None:
        Gb = int(graph_block)
        assert Gb == G or Gb % 8 == 0, "graph_block must be G or a multiple of 8"
        assert Gb <= G
    elif G <= 8:
        Gb = G
    else:
        Gb = min(128, max(8, ((G // 4) // 8) * 8))

    # Node chunk: multiple of 8 (or full N), targeting ~2 MiB x blocks.
    if node_chunk is not None:
        Nc = int(node_chunk)
        assert Nc == N or Nc % 8 == 0, "node_chunk must be N or a multiple of 8"
        assert Nc <= N
    elif N <= 8:
        Nc = N
    else:
        target = 2 << 20
        Nc = max(8, (target // max(1, Gb * H * x_itemsize)) // 8 * 8)
        if Nc >= N:
            Nc = N

    # Shrink until the working set fits the VMEM budget.
    def usage(gb, nc):
        return (2 * gb * nc * H * x_itemsize      # x block (double-buffered)
                + H * H * w_itemsize + H * 4      # weight + bias (single buffer)
                + 2 * gb * H * 4                  # output block
                + gb * H * 4)                     # f32 accumulator scratch

    while usage(Gb, Nc) > vmem_budget:
        if Nc > 8:
            Nc = max(8, ((Nc // 2) // 8) * 8)
        elif Gb > 8:
            Gb = max(8, ((Gb // 2) // 8) * 8)
        else:
            break
    return Gb, Nc


def _make_kernel(N, Nc, ragged_nodes):
    def kernel(x_ref, w_ref, b_ref, o_ref, acc_ref):
        # x_ref : (Gb, Nc, H) node-feature chunk for Gb graphs
        # w_ref : (H, H)      PyTorch Linear weight (out, in) — NOT transposed
        # b_ref : (1, H)      Linear bias
        # o_ref : (Gb, H)     aggregated + ReLU'd outputs
        # acc_ref: (Gb, H) f32 node-sum accumulator (persists across node chunks)
        n = pl.program_id(1)

        @pl.when(n == 0)
        def _init():
            acc_ref[...] = jnp.zeros_like(acc_ref)

        chunk = x_ref[...].astype(jnp.float32)            # f32 accumulation always
        if ragged_nodes:
            # Last node chunk overruns N: zero the out-of-range node rows so
            # they cannot contaminate the accumulator.
            node_idx = n * Nc + jax.lax.broadcasted_iota(jnp.int32, chunk.shape, 1)
            chunk = jnp.where(node_idx < N, chunk, 0.0)
        acc_ref[...] += jnp.sum(chunk, axis=1)            # partial node sum

        @pl.when(n == pl.num_programs(1) - 1)
        def _finalize():
            xs = acc_ref[...]                              # (Gb, H) total node sum
            # xs @ W.T via dot_general contracting on the weight's input dim.
            y = jax.lax.dot_general(
                xs, w_ref[...],
                dimension_numbers=(((1,), (1,)), ((), ())),
                preferred_element_type=jnp.float32)
            y = y + jnp.float32(N) * b_ref[...].astype(jnp.float32)   # N * bias
            o_ref[...] = jnp.maximum(y, 0.0).astype(o_ref.dtype)      # ReLU

    return kernel


def schema_aggregator(x, weight, bias, *, graph_block=None, node_chunk=None):
    """x: [G, N, H] (f32 or bf16), weight: [H, H] (PyTorch out x in), bias: [H]."""
    G, N, H = x.shape
    assert weight.shape == (H, H) and bias.shape == (H,)

    x_it = jnp.dtype(x.dtype).itemsize
    w_it = jnp.dtype(weight.dtype).itemsize

    vmem_cap = _vmem_capacity_bytes()
    vmem_limit = int(0.8 * vmem_cap)       # headroom for compiler scratch/sems
    vmem_budget = int(0.7 * vmem_cap)      # budget for our blocks

    Gb, Nc = _pick_blocks(G, N, H, x_it, w_it, vmem_budget, graph_block, node_chunk)

    b2 = bias.reshape(1, H)
    kernel = _make_kernel(N, Nc, (N % Nc) != 0)

    cost = pl.CostEstimate(
        flops=2 * G * H * H + 2 * G * N * H,
        transcendentals=0,
        bytes_accessed=G * N * H * x_it + H * H * w_it
                       + H * jnp.dtype(bias.dtype).itemsize + G * H * 4,
    )

    def call(const_pipeline_mode):
        in_specs = [
            pl.BlockSpec((Gb, Nc, H), lambda g, n: (g, n, 0)),          # streamed x
            pl.BlockSpec((H, H), lambda g, n: (0, 0),
                         pipeline_mode=const_pipeline_mode),            # shared weight
            pl.BlockSpec((1, H), lambda g, n: (0, 0),
                         pipeline_mode=const_pipeline_mode),            # shared bias
        ]
        return pl.pallas_call(
            kernel,
            out_shape=jax.ShapeDtypeStruct((G, H), jnp.float32),
            grid_spec=pltpu.PrefetchScalarGridSpec(
                num_scalar_prefetch=0,
                grid=(pl.cdiv(G, Gb), pl.cdiv(N, Nc)),   # node (reduction) axis last
                in_specs=in_specs,
                out_specs=pl.BlockSpec((Gb, H), lambda g, n: (g, 0)),
                scratch_shapes=[pltpu.VMEM((Gb, H), jnp.float32)],
            ),
            compiler_params=pltpu.CompilerParams(
                dimension_semantics=("parallel", "arbitrary"),
                vmem_limit_bytes=vmem_limit,
            ),
            cost_estimate=cost,
        )(x, weight, b2)

    try:
        # Constant (grid-invariant) weight/bias: single buffer, no re-DMA.
        return call(pl.Buffered(1))
    except Exception:
        # Fallback: default pipelining (semantically identical).
        return call(None)


def _reference(x, weight, bias):
    # Pure-JAX reference mirroring the PyTorch module (per-node Linear, sum, ReLU).
    y = jnp.einsum("gnh,oh->gno", x.astype(jnp.float32), weight.astype(jnp.float32),
                   precision=jax.lax.Precision.HIGHEST) + bias.astype(jnp.float32)
    return jax.nn.relu(jnp.sum(y, axis=1))


if __name__ == "__main__":
    key = jax.random.PRNGKey(0)
    kx, kw, kb, kx2 = jax.random.split(key, 4)

    # Small deterministic problem: 2 graphs, 8 nodes each, hidden=32.
    G, N, H = 2, 8, 32
    bound = 1.0 / (H ** 0.5)
    x = jax.random.normal(kx, (G, N, H), dtype=jnp.float32)
    weight = jax.random.uniform(kw, (H, H), minval=-bound, maxval=bound,
                                dtype=jnp.float32)
    bias = jax.random.uniform(kb, (H,), minval=-bound, maxval=bound,
                              dtype=jnp.float32)

    out = jax.block_until_ready(schema_aggregator(x, weight, bias))
    ref = _reference(x, weight, bias)
    assert out.shape == (G, H)
    assert jnp.allclose(out, ref, atol=2e-2, rtol=2e-2), "mismatch vs reference (f32)"

    # Ragged blocks: partial last graph block + masked partial node chunk.
    G2, N2 = 13, 11
    x2 = jax.random.normal(kx2, (G2, N2, H), dtype=jnp.float32)
    out2 = jax.block_until_ready(
        schema_aggregator(x2, weight, bias, graph_block=8, node_chunk=8))
    ref2 = _reference(x2, weight, bias)
    assert out2.shape == (G2, H)
    assert jnp.allclose(out2, ref2, atol=2e-2, rtol=2e-2), "mismatch vs reference (ragged)"

    # bf16-streamed x (production path: halves HBM traffic; f32 accumulation in-kernel).
    xb = x2.astype(jnp.bfloat16)
    out3 = jax.block_until_ready(
        schema_aggregator(xb, weight, bias, graph_block=8, node_chunk=8))
    ref3 = _reference(xb, weight, bias)
    assert jnp.allclose(out3, ref3, atol=5e-2, rtol=5e-2), "mismatch vs reference (bf16)"

    print("KERNEL_OK")
</pallas_src>

<mosaic_0001>
module attributes {stable_mosaic.version = 11 : i64} {
  func.func @kernel(%arg0: i32, %arg1: i32, %arg2: memref<2x8x32xf32, #tpu.memory_space<vmem>>, %arg3: memref<32x32xf32, #tpu.memory_space<vmem>>, %arg4: memref<1x32xf32, #tpu.memory_space<vmem>>, %arg5: memref<2x32xf32, #tpu.memory_space<vmem>>, %arg6: memref<2x32xf32, #tpu.memory_space<vmem>>) attributes {dimension_semantics = [#tpu.dimension_semantics<parallel>, #tpu.dimension_semantics<arbitrary>], iteration_bounds = array<i64: 1, 1>, scalar_prefetch = 0 : i64, scratch_operands = 1 : i64, tpu.core_type = #tpu.core_type<tc>, window_params = [{transform_indices = @transform_0, window_bounds = array<i64: 2, 8, 32>}, {pipeline_mode = #tpu.pipeline_mode<synchronous>, transform_indices = @transform_1, window_bounds = array<i64: 32, 32>}, {pipeline_mode = #tpu.pipeline_mode<synchronous>, transform_indices = @transform_2, window_bounds = array<i64: 1, 32>}, {transform_indices = @transform_3, window_bounds = array<i64: 2, 32>}]} {
    %c0_i32 = arith.constant 0 : i32
    %0 = arith.cmpi eq, %arg1, %c0_i32 : i32
    %1 = arith.extui %0 : i1 to i32
    %c0_i32_0 = arith.constant 0 : i32
    %2 = arith.cmpi ne, %1, %c0_i32_0 : i32
    scf.if %2 {
      %cst_9 = arith.constant 0.000000e+00 : f32
      %11 = vector.broadcast %cst_9 : f32 to vector<2x32xf32>
      %c0_10 = arith.constant 0 : index
      %c0_11 = arith.constant 0 : index
      %12 = vector.load %arg6[%c0_10, %c0_11] : memref<2x32xf32, #tpu.memory_space<vmem>>, vector<2x32xf32>
      tpu.vector_store %arg6[%c0_10, %c0_11], %11 {strides = array<i32>} : memref<2x32xf32, #tpu.memory_space<vmem>>, vector<2x32xf32>,
    } else {
    }
    %c0 = arith.constant 0 : index
    %c0_1 = arith.constant 0 : index
    %c0_2 = arith.constant 0 : index
    %3 = vector.load %arg2[%c0, %c0_1, %c0_2] : memref<2x8x32xf32, #tpu.memory_space<vmem>>, vector<2x8x32xf32>
    %c0_3 = arith.constant 0 : index
    %c0_4 = arith.constant 0 : index
    %4 = vector.load %arg6[%c0_3, %c0_4] : memref<2x32xf32, #tpu.memory_space<vmem>>, vector<2x32xf32>
    %cst = arith.constant dense<0.000000e+00> : vector<2x32xf32>
    %5 = vector.multi_reduction <add>, %3, %cst [1] : vector<2x8x32xf32> to vector<2x32xf32>
    %6 = arith.addf %4, %5 : vector<2x32xf32>
    %c0_5 = arith.constant 0 : index
    %c0_6 = arith.constant 0 : index
    %7 = vector.load %arg6[%c0_5, %c0_6] : memref<2x32xf32, #tpu.memory_space<vmem>>, vector<2x32xf32>
    tpu.vector_store %arg6[%c0_5, %c0_6], %6 {strides = array<i32>} : memref<2x32xf32, #tpu.memory_space<vmem>>, vector<2x32xf32>,
    %c0_i32_7 = arith.constant 0 : i32
    %8 = arith.cmpi eq, %arg1, %c0_i32_7 : i32
    %9 = arith.extui %8 : i1 to i32
    %c0_i32_8 = arith.constant 0 : i32
    %10 = arith.cmpi ne, %9, %c0_i32_8 : i32
    scf.if %10 {
      %c0_9 = arith.constant 0 : index
      %c0_10 = arith.constant 0 : index
      %11 = vector.load %arg6[%c0_9, %c0_10] : memref<2x32xf32, #tpu.memory_space<vmem>>, vector<2x32xf32>
      %c0_11 = arith.constant 0 : index
      %c0_12 = arith.constant 0 : index
      %12 = vector.load %arg3[%c0_11, %c0_12] : memref<32x32xf32, #tpu.memory_space<vmem>>, vector<32x32xf32>
      %cst_13 = arith.constant dense<0.000000e+00> : vector<2x32xf32>
      %13 = tpu.matmul %11, %12, %cst_13 {dimension_numbers = #tpu.dot_dimension_numbers<[1], [1], [0], [0], [0, 0, 1, 0], [], []>} : vector<2x32xf32>, vector<32x32xf32>, vector<2x32xf32> -> vector<2x32xf32>
      %c0_14 = arith.constant 0 : index
      %c0_15 = arith.constant 0 : index
      %14 = vector.load %arg4[%c0_14, %c0_15] : memref<1x32xf32, #tpu.memory_space<vmem>>, vector<1x32xf32>
      %cst_16 = arith.constant 8.000000e+00 : f32
      %15 = vector.broadcast %cst_16 : f32 to vector<1x32xf32>
      %16 = arith.mulf %15, %14 : vector<1x32xf32>
      %17 = vector.broadcast %16 : vector<1x32xf32> to vector<2x32xf32>
      %18 = arith.addf %13, %17 : vector<2x32xf32>
      %cst_17 = arith.constant 0.000000e+00 : f32
      %19 = vector.broadcast %cst_17 : f32 to vector<2x32xf32>
      %20 = arith.maximumf %18, %19 : vector<2x32xf32>
      %c0_18 = arith.constant 0 : index
      %c0_19 = arith.constant 0 : index
      %21 = vector.load %arg5[%c0_18, %c0_19] : memref<2x32xf32, #tpu.memory_space<vmem>>, vector<2x32xf32>
      tpu.vector_store %arg5[%c0_18, %c0_19], %20 {strides = array<i32>} : memref<2x32xf32, #tpu.memory_space<vmem>>, vector<2x32xf32>,
    } else {
    }
    return
  }
  func.func @transform_0(%arg0: i32, %arg1: i32) -> (i32, i32, i32) {
    %c0_i32 = arith.constant 0 : i32
    %c0_i32_0 = arith.constant 0 : i32
    return %arg0, %arg1, %c0_i32 : i32, i32, i32
  }
  func.func @transform_1(%arg0: i32, %arg1: i32) -> (i32, i32) {
    %c0_i32 = arith.constant 0 : i32
    %c0_i32_0 = arith.constant 0 : i32
    %c0_i32_1 = arith.constant 0 : i32
    return %c0_i32, %c0_i32_0 : i32, i32
  }
  func.func @transform_2(%arg0: i32, %arg1: i32) -> (i32, i32) {
    %c0_i32 = arith.constant 0 : i32
    %c0_i32_0 = arith.constant 0 : i32
    %c0_i32_1 = arith.constant 0 : i32
    return %c0_i32, %c0_i32_0 : i32, i32
  }
  func.func @transform_3(%arg0: i32, %arg1: i32) -> (i32, i32) {
    %c0_i32 = arith.constant 0 : i32
    %c0_i32_0 = arith.constant 0 : i32
    return %arg0, %c0_i32 : i32, i32
  }
}

module attributes {stable_mosaic.version = 11 : i64} {
  func.func @kernel(%arg0: i32, %arg1: i32, %arg2: memref<2x8x32xf32, #tpu.memory_space<vmem>>, %arg3: memref<32x32xf32, #tpu.memory_space<vmem>>, %arg4: memref<1x32xf32, #tpu.memory_space<vmem>>, %arg5: memref<2x32xf32, #tpu.memory_space<vmem>>, %arg6: memref<2x32xf32, #tpu.memory_space<vmem>>) attributes {dimension_semantics = [#tpu.dimension_semantics<parallel>, #tpu.dimension_semantics<arbitrary>], iteration_bounds = array<i64: 1, 1>, scalar_prefetch = 0 : i64, scratch_operands = 1 : i64, tpu.core_type = #tpu.core_type<tc>, window_params = [{transform_indices = @transform_0, window_bounds = array<i64: 2, 8, 32>}, {pipeline_mode = #tpu.pipeline_mode<synchronous>, transform_indices = @transform_1, window_bounds = array<i64: 32, 32>}, {pipeline_mode = #tpu.pipeline_mode<synchronous>, transform_indices = @transform_2, window_bounds = array<i64: 1, 32>}, {transform_indices = @transform_3, window_bounds = array<i64: 2, 32>}]} {
    %c0_i32 = arith.constant 0 : i32
    %0 = arith.cmpi eq, %arg1, %c0_i32 : i32
    %1 = arith.extui %0 : i1 to i32
    %c0_i32_0 = arith.constant 0 : i32
    %2 = arith.cmpi ne, %1, %c0_i32_0 : i32
    scf.if %2 {
      %cst_9 = arith.constant 0.000000e+00 : f32
      %11 = vector.broadcast %cst_9 : f32 to vector<2x32xf32>
      %c0_10 = arith.constant 0 : index
      %c0_11 = arith.constant 0 : index
      %12 = vector.load %arg6[%c0_10, %c0_11] : memref<2x32xf32, #tpu.memory_space<vmem>>, vector<2x32xf32>
      tpu.vector_store %arg6[%c0_10, %c0_11], %11 {strides = array<i32>} : memref<2x32xf32, #tpu.memory_space<vmem>>, vector<2x32xf32>,
    } else {
    }
    %c0 = arith.constant 0 : index
    %c0_1 = arith.constant 0 : index
    %c0_2 = arith.constant 0 : index
    %3 = vector.load %arg2[%c0, %c0_1, %c0_2] : memref<2x8x32xf32, #tpu.memory_space<vmem>>, vector<2x8x32xf32>
    %c0_3 = arith.constant 0 : index
    %c0_4 = arith.constant 0 : index
    %4 = vector.load %arg6[%c0_3, %c0_4] : memref<2x32xf32, #tpu.memory_space<vmem>>, vector<2x32xf32>
    %cst = arith.constant dense<0.000000e+00> : vector<2x32xf32>
    %5 = vector.multi_reduction <add>, %3, %cst [1] : vector<2x8x32xf32> to vector<2x32xf32>
    %6 = arith.addf %4, %5 : vector<2x32xf32>
    %c0_5 = arith.constant 0 : index
    %c0_6 = arith.constant 0 : index
    %7 = vector.load %arg6[%c0_5, %c0_6] : memref<2x32xf32, #tpu.memory_space<vmem>>, vector<2x32xf32>
    tpu.vector_store %arg6[%c0_5, %c0_6], %6 {strides = array<i32>} : memref<2x32xf32, #tpu.memory_space<vmem>>, vector<2x32xf32>,
    %c0_i32_7 = arith.constant 0 : i32
    %8 = arith.cmpi eq, %arg1, %c0_i32_7 : i32
    %9 = arith.extui %8 : i1 to i32
    %c0_i32_8 = arith.constant 0 : i32
    %10 = arith.cmpi ne, %9, %c0_i32_8 : i32
    scf.if %10 {
      %c0_9 = arith.constant 0 : index
      %c0_10 = arith.constant 0 : index
      %11 = vector.load %arg6[%c0_9, %c0_10] : memref<2x32xf32, #tpu.memory_space<vmem>>, vector<2x32xf32>
      %c0_11 = arith.constant 0 : index
      %c0_12 = arith.constant 0 : index
      %12 = vector.load %arg3[%c0_11, %c0_12] : memref<32x32xf32, #tpu.memory_space<vmem>>, vector<32x32xf32>
      %cst_13 = arith.constant dense<0.000000e+00> : vector<2x32xf32>
      %13 = tpu.matmul %11, %12, %cst_13 {dimension_numbers = #tpu.dot_dimension_numbers<[1], [1], [0], [0], [0, 0, 1, 0], [], []>} : vector<2x32xf32>, vector<32x32xf32>, vector<2x32xf32> -> vector<2x32xf32>
      %c0_14 = arith.constant 0 : index
      %c0_15 = arith.constant 0 : index
      %14 = vector.load %arg4[%c0_14, %c0_15] : memref<1x32xf32, #tpu.memory_space<vmem>>, vector<1x32xf32>
      %cst_16 = arith.constant 8.000000e+00 : f32
      %15 = vector.broadcast %cst_16 : f32 to vector<1x32xf32>
      %16 = arith.mulf %15, %14 : vector<1x32xf32>
      %17 = vector.broadcast %16 : vector<1x32xf32> to vector<2x32xf32>
      %18 = arith.addf %13, %17 : vector<2x32xf32>
      %cst_17 = arith.constant 0.000000e+00 : f32
      %19 = vector.broadcast %cst_17 : f32 to vector<2x32xf32>
      %20 = arith.maximumf %18, %19 : vector<2x32xf32>
      %c0_18 = arith.constant 0 : index
      %c0_19 = arith.constant 0 : index
      %21 = vector.load %arg5[%c0_18, %c0_19] : memref<2x32xf32, #tpu.memory_space<vmem>>, vector<2x32xf32>
      tpu.vector_store %arg5[%c0_18, %c0_19], %20 {strides = array<i32>} : memref<2x32xf32, #tpu.memory_space<vmem>>, vector<2x32xf32>,
    } else {
    }
    return
  }
  func.func @transform_0(%arg0: i32, %arg1: i32) -> (i32, i32, i32) {
    %c0_i32 = arith.constant 0 : i32
    %c0_i32_0 = arith.constant 0 : i32
    return %arg0, %arg1, %c0_i32 : i32, i32, i32
  }
  func.func @transform_1(%arg0: i32, %arg1: i32) -> (i32, i32) {
    %c0_i32 = arith.constant 0 : i32
    %c0_i32_0 = arith.constant 0 : i32
    %c0_i32_1 = arith.constant 0 : i32
    return %c0_i32, %c0_i32_0 : i32, i32
  }
  func.func @transform_2(%arg0: i32, %arg1: i32) -> (i32, i32) {
    %c0_i32 = arith.constant 0 : i32
    %c0_i32_0 = arith.constant 0 : i32
    %c0_i32_1 = arith.constant 0 : i32
    return %c0_i32, %c0_i32_0 : i32, i32
  }
  func.func @transform_3(%arg0: i32, %arg1: i32) -> (i32, i32) {
    %c0_i32 = arith.constant 0 : i32
    %c0_i32_0 = arith.constant 0 : i32
    return %arg0, %c0_i32 : i32, i32
  }
}

</mosaic_0001>

<llo_original>
// kernel: tpu_custom_call.1
$region0: #{tpu_custom_call.1}
  #allocation0 [shape = 'u32[]', space=smem, size = 0x4, offset = 0x4, fixed_abs, tag = 'smem constant byte address 0x4 - core index']
  #allocation1 [shape = 'u32[144,128]{1,0:T(1,128)}', space=vmem, size = 0x12000, scoped, tag = 'internal scratch']
  #allocation2 [shape = 'f32[2,32]{1,0:T(2,128)}', space=vmem, size = 0x400, scoped, tag = 'scratch operand']
  %s0 = inlined_call_operand.hbm [shape: f32[2,8,32], index: 0, kind: input, shape index: {}]
  %s1 = inlined_call_operand.hbm [shape: f32[32,32], index: 1, kind: input, shape index: {}]
  %s2 = inlined_call_operand.vmem [shape: f32[1,32], index: 2, kind: input, shape index: {}]
  %s3 = inlined_call_operand.hbm [shape: f32[2,32], index: 3, kind: output, shape index: {}]
  %s4 = sld [smem:[#allocation0]]
  $region38: #{tpu_custom_call.1} parent=0
    _
  %s6 = ssub.s32 1, %s4
  %s7 = scalar_select 0, %s6, %s4
  $region1: #{tpu_custom_call.1} parent=0
    #allocation3 [shape = 'u8[8192]{0}', space=vmem, size = 0x2000, scoped, tag = 'input window, operand 0, single buffered']
    #allocation4 [shape = 's32[1]{0}', space=sflag, size = 0x4, scoped, tag = 'scoped memory for tpu_custom_call.1']
    #allocation5 [shape = 's32[1]{0}', space=sflag, size = 0x4, scoped, tag = 'scoped memory for tpu_custom_call.1']
    #allocation6 [shape = 'u8[16384]{0}', space=vmem, size = 0x4000, scoped, tag = 'input window, operand 1, single buffered']
    #allocation7 [shape = 's32[1]{0}', space=sflag, size = 0x4, scoped, tag = 'scoped memory for tpu_custom_call.1']
    #allocation8 [shape = 'u8[1024]{0}', space=vmem, size = 0x400, scoped, tag = 'output window, operand 0, single buffered']
    %8 = vsyncpa [#allocation4], 0
    %9 = vsyncpa [#allocation7], 0
    %10 = vsyncpa [#allocation5], 0
    // Predicated region
    $region2: #{tpu_custom_call.1} parent=1 // pred_check
      _
    $region3: #{tpu_custom_call.1} parent=1 // pred_check_branch
      %12 = sbr.rel (0) target = $region5
    $region4: #{tpu_custom_call.1} parent=1 // pred_region
      %s14 = ssub.s32 256, 256
      %15 = vsyncadd [#allocation4], %s14
      %s16 = sshll.u32 [#allocation3], 4
      %s17 = int_to_ptr.vmem [resolvable:$true] %s16
      %22 = dma.hbm_to_vmem [thread:$0]  %s0, 256, %s17, [#allocation4], 128, 128, 8
    $region5: #{tpu_custom_call.1} parent=1 // pred_fallthru
      _
    // Predicated region
    $region6: #{tpu_custom_call.1} parent=1 // pred_check
      _
    $region7: #{tpu_custom_call.1} parent=1 // pred_check_branch
      %24 = sbr.rel (0) target = $region9
    $region8: #{tpu_custom_call.1} parent=1 // pred_region
      %s26 = ssub.s32 512, 512
      %27 = vsyncadd [#allocation7], %s26
      %s28 = sshll.u32 [#allocation6], 4
      %s29 = int_to_ptr.vmem [resolvable:$true] %s28
      %34 = dma.hbm_to_vmem [thread:$0]  %s1, 512, %s29, [#allocation7], 128, 128, 8
    $region9: #{tpu_custom_call.1} parent=1 // pred_fallthru
      _
    // Predicated region
    $region10: #{tpu_custom_call.1} parent=1 // pred_check
      _
    $region11: #{tpu_custom_call.1} parent=1 // pred_check_branch
      %36 = sbr.rel (0) target = $region13
    $region12: #{tpu_custom_call.1} parent=1 // pred_region
      _
    $region13: #{tpu_custom_call.1} parent=1 // pred_fallthru
      _
    // Predicated region
    $region14: #{tpu_custom_call.1} parent=1 // pred_check
      _
    $region15: #{tpu_custom_call.1} parent=1 // pred_check_branch
      %38 = sbr.rel (0) target = $region17
    $region16: #{tpu_custom_call.1} parent=1 // pred_region
      %39 = dma.done [#allocation4], 256
    $region17: #{tpu_custom_call.1} parent=1 // pred_fallthru
      _
    // Predicated region
    $region18: #{tpu_custom_call.1} parent=1 // pred_check
      _
    $region19: #{tpu_custom_call.1} parent=1 // pred_check_branch
      %41 = sbr.rel (0) target = $region21
    $region20: #{tpu_custom_call.1} parent=1 // pred_region
      %42 = dma.done [#allocation7], 512
    $region21: #{tpu_custom_call.1} parent=1 // pred_fallthru
      _
    %p43 = scmp.eq.s32.totalorder 0, 0
    // Predicated region
    $region22: #{tpu_custom_call.1} parent=1 // pred_check
      %p44 = pneg %p43
    $region23: #{tpu_custom_call.1} parent=1 // pred_check_branch
      %46 = sbr.rel (%p44) target = $region25
    $region24: #{tpu_custom_call.1} parent=1 // pred_region
      %vm47 = vcmask 254976
      %48 = vst.msk [vmem:[#allocation2] sm:$0x3] %vm47, 0.0
    $region25: #{tpu_custom_call.1} parent=1 // pred_fallthru
      _
    %v49 = vld [vmem:[#allocation3] sm:$0xff]
    %v50 = vld [vmem:[#allocation3 + $0x8] sm:$0xff]
    %v51 = vld [vmem:[#allocation2] sm:$0x3]
    %vm52 = vcmask 261120
    %v53 = vsel %vm52, %v49, 0.0
    %v54 = vrot.slane %v53, 4
    %v55 = vadd.f32 %v53, %v54
    %v56 = vrot.slane %v55, 2
    %v57 = vadd.f32 %v55, %v56
    %v58 = vrot.slane %v57, 1
    %v59 = vadd.f32 %v57, %v58
    %v60 = vsel %vm52, %v50, 0.0
    %v61 = vrot.slane %v60, 4
    %v62 = vadd.f32 %v60, %v61
    %v63 = vrot.slane %v62, 2
    %v64 = vadd.f32 %v62, %v63
    %v65 = vrot.slane %v64, 1
    %v66 = vadd.f32 %v64, %v65
    %vm69 = vcmask 1041409
    %v70 = vsel %vm69, %v66, %v59
    %v72 = vadd.f32 %v51, %v70
    %vm73 = vcmask 254976
    %74 = vst.msk [vmem:[#allocation2] sm:$0x3] %vm73, %v72
    // Predicated region
    $region26: #{tpu_custom_call.1} parent=1 // pred_check
      %p75 = pneg %p43
    $region27: #{tpu_custom_call.1} parent=1 // pred_check_branch
      %77 = sbr.rel (%p75) target = $region29
    $region28: #{tpu_custom_call.1} parent=1 // pred_region
      %v78 = vld [vmem:[#allocation2] sm:$0x3]
      %v79 = vld [vmem:[#allocation6] sm:$0xff]
      %v80 = vld [vmem:[#allocation6 + $0x8] sm:$0xff]
      %v81 = vld [vmem:[#allocation6 + $0x10] sm:$0xff]
      %v82 = vld [vmem:[#allocation6 + $0x18] sm:$0xff]
      %v83 = vld [vmem:[%s2] sm:$0x1]
      %v84 = vmul.f32 %v83, 8.0
      %v86 = vlaneseq
      %v87 = vshrl.u32 %v86, 7
      %v88 = vsub.s32 0, %v87
      %v89 = vrot.slane %v84, %v88
      %v92 = vsel %vm52, %v78, 0
      %v95 = vsel %vm52, %v79, 0
      %v98 = vsel %vm52, %v80, 0
      %v101 = vsel %vm52, %v81, 0
      %v104 = vsel %vm52, %v82, 0
      %106 = vmatprep.subr.mxu0 0.0
      %107 = vmatpush1.xpose.msra.mxu0 %v95
      %108 = vmatprep.subr.mxu0 0.0
      %109 = vmatpush1.xpose.msra.mxu0 %v98
      %110 = vmatprep.subr.mxu0 0.0
      %111 = vmatpush1.xpose.msra.mxu0 %v101
      %112 = vmatprep.subr.mxu0 0.0
      %113 = vmatpush1.xpose.msra.mxu0 %v104
      %114 = vmatprep.subr.mxu0 0.0
      %115 = vmatpush1.xpose.msra.mxu0 0.0
      %116 = vmatprep.subr.mxu0 0.0
      %117 = vmatpush1.xpose.msra.mxu0 0.0
      %118 = vmatprep.subr.mxu0 0.0
      %119 = vmatpush1.xpose.msra.mxu0 0.0
      %120 = vmatprep.subr.mxu0 0.0
      %121 = vmatpush1.xpose.msra.mxu0 0.0
      %122 = vmatprep.subr.mxu0 0.0
      %123 = vmatpush1.xpose.msra.mxu0 0.0
      %124 = vmatprep.subr.mxu0 0.0
      %125 = vmatpush1.xpose.msra.mxu0 0.0
      %126 = vmatprep.subr.mxu0 0.0
      %127 = vmatpush1.xpose.msra.mxu0 0.0
      %128 = vmatprep.subr.mxu0 0.0
      %129 = vmatpush1.xpose.msra.mxu0 0.0
      %130 = vmatprep.subr.mxu0 0.0
      %131 = vmatpush1.xpose.msra.mxu0 0.0
      %132 = vmatprep.subr.mxu0 0.0
      %133 = vmatpush1.xpose.msra.mxu0 0.0
      %134 = vmatprep.subr.mxu0 0.0
      %135 = vmatpush1.xpose.msra.mxu0 0.0
      %136 = vmatprep.subr.mxu0 0.0
      %137 = vmatpush1.xpose.msra.mxu0 0.0
      %138 = vmatprep.subr.mxu0 0.0
      %139 = vmatpush1.xpose.msra.mxu0 0.0
      %140 = vmatprep.subr.mxu0 0.0
      %141 = vmatpush1.xpose.msra.mxu0 0.0
      %142 = vmatprep.subr.mxu0 0.0
      %143 = vmatpush1.xpose.msra.mxu0 0.0
      %144 = vmatprep.subr.mxu0 0.0
      %145 = vmatpush1.xpose.msra.mxu0 0.0
      %146 = vmatprep.subr.mxu0 0.0
      %147 = vmatpush1.xpose.msra.mxu0 0.0
      %148 = vmatprep.subr.mxu0 0.0
      %149 = vmatpush1.xpose.msra.mxu0 0.0
      %150 = vmatprep.subr.mxu0 0.0
      %151 = vmatpush1.xpose.msra.mxu0 0.0
      %152 = vmatprep.subr.mxu0 0.0
      %153 = vmatpush1.xpose.msra.mxu0 0.0
      %154 = vmatprep.subr.mxu0 0.0
      %155 = vmatpush1.xpose.msra.mxu0 0.0
      %156 = vmatprep.subr.mxu0 0.0
      %157 = vmatpush1.xpose.msra.mxu0 0.0
      %158 = vmatprep.subr.mxu0 0.0
      %159 = vmatpush1.xpose.msra.mxu0 0.0
      %160 = vmatprep.subr.mxu0 0.0
      %161 = vmatpush1.xpose.msra.mxu0 0.0
      %162 = vmatprep.subr.mxu0 0.0
      %163 = vmatpush1.xpose.msra.mxu0 0.0
      %164 = vmatprep.subr.mxu0 0.0
      %165 = vmatpush1.xpose.msra.mxu0 0.0
      %166 = vmatprep.subr.mxu0 0.0
      %167 = vmatpush1.xpose.msra.mxu0 0.0
      %168 = vmatprep.subr.mxu0 0.0
      %169 = vmatpush1.xpose.msra.mxu0 0.0
      %170 = vmatprep.mubr.f32.mxu0 0.0
      %171 = vmatmul.mubr.f32.gmra.mrb[0].mxu0 %v92
      %v172 = vpop.f32.mrb[0].mxu0
      %v173 = vadd.f32 %v89, %v172
      %v174 = vpop.f32.mrb[0].mxu0
      %175 = vdwg.mxu0
      %v176 = vmax.f32 %v173, 0.0
      %177 = vst.msk [vmem:[#allocation8] sm:$0x3] %vm73, %v176
    $region29: #{tpu_custom_call.1} parent=1 // pred_fallthru
      _
    // Predicated region
    $region30: #{tpu_custom_call.1} parent=1 // pred_check
      _
    $region31: #{tpu_custom_call.1} parent=1 // pred_check_branch
      %179 = sbr.rel (0) target = $region33
    $region32: #{tpu_custom_call.1} parent=1 // pred_region
      %s181 = ssub.s32 32, 32
      %182 = vsyncadd [#allocation5], %s181
      %s184 = sshll.u32 [#allocation8], 4
      %s185 = int_to_ptr.vmem [resolvable:$true] %s184
      %187 = dma.vmem_to_hbm [thread:$0]  %s185, 32, %s3, [#allocation5]
    $region33: #{tpu_custom_call.1} parent=1 // pred_fallthru
      _
    // Predicated region
    $region34: #{tpu_custom_call.1} parent=1 // pred_check
      _
    $region35: #{tpu_custom_call.1} parent=1 // pred_check_branch
      %189 = sbr.rel (0) target = $region37
    $region36: #{tpu_custom_call.1} parent=1 // pred_region
      %190 = dma.done [#allocation5], 32
    $region37: #{tpu_custom_call.1} parent=1 // pred_fallthru
      _
    %191 = vsyncpa [#allocation4], 1
    %192 = vsyncpa [#allocation7], 1
    %193 = vsyncpa [#allocation5], 1

// kernel: tpu_custom_call.1
$region0: #{tpu_custom_call.1}
  #allocation0 [shape = 'u32[]', space=smem, size = 0x4, offset = 0x4, fixed_abs, tag = 'smem constant byte address 0x4 - core index']
  #allocation1 [shape = 'u32[144,128]{1,0:T(1,128)}', space=vmem, size = 0x12000, scoped, tag = 'internal scratch']
  #allocation2 [shape = 'f32[2,32]{1,0:T(2,128)}', space=vmem, size = 0x400, scoped, tag = 'scratch operand']
  %s0 = inlined_call_operand.hbm [shape: f32[2,8,32], index: 0, kind: input, shape index: {}]
  %s1 = inlined_call_operand.hbm [shape: f32[32,32], index: 1, kind: input, shape index: {}]
  %s2 = inlined_call_operand.vmem [shape: f32[1,32], index: 2, kind: input, shape index: {}]
  %s3 = inlined_call_operand.hbm [shape: f32[2,32], index: 3, kind: output, shape index: {}]
  %s4 = sld [smem:[#allocation0]]
  $region38: #{tpu_custom_call.1} parent=0
    _
  %s6 = ssub.s32 1, %s4
  %s7 = scalar_select 0, %s6, %s4
  $region1: #{tpu_custom_call.1} parent=0
    #allocation3 [shape = 'u8[8192]{0}', space=vmem, size = 0x2000, scoped, tag = 'input window, operand 0, single buffered']
    #allocation4 [shape = 's32[1]{0}', space=sflag, size = 0x4, scoped, tag = 'scoped memory for tpu_custom_call.1']
    #allocation5 [shape = 's32[1]{0}', space=sflag, size = 0x4, scoped, tag = 'scoped memory for tpu_custom_call.1']
    #allocation6 [shape = 'u8[16384]{0}', space=vmem, size = 0x4000, scoped, tag = 'input window, operand 1, single buffered']
    #allocation7 [shape = 's32[1]{0}', space=sflag, size = 0x4, scoped, tag = 'scoped memory for tpu_custom_call.1']
    #allocation8 [shape = 'u8[1024]{0}', space=vmem, size = 0x400, scoped, tag = 'output window, operand 0, single buffered']
    %8 = vsyncpa [#allocation4], 0
    %9 = vsyncpa [#allocation7], 0
    %10 = vsyncpa [#allocation5], 0
    // Predicated region
    $region2: #{tpu_custom_call.1} parent=1 // pred_check
      _
    $region3: #{tpu_custom_call.1} parent=1 // pred_check_branch
      %12 = sbr.rel (0) target = $region5
    $region4: #{tpu_custom_call.1} parent=1 // pred_region
      %s14 = ssub.s32 256, 256
      %15 = vsyncadd [#allocation4], %s14
      %s16 = sshll.u32 [#allocation3], 4
      %s17 = int_to_ptr.vmem [resolvable:$true] %s16
      %22 = dma.hbm_to_vmem [thread:$0]  %s0, 256, %s17, [#allocation4], 128, 128, 8
    $region5: #{tpu_custom_call.1} parent=1 // pred_fallthru
      _
    // Predicated region
    $region6: #{tpu_custom_call.1} parent=1 // pred_check
      _
    $region7: #{tpu_custom_call.1} parent=1 // pred_check_branch
      %24 = sbr.rel (0) target = $region9
    $region8: #{tpu_custom_call.1} parent=1 // pred_region
      %s26 = ssub.s32 512, 512
      %27 = vsyncadd [#allocation7], %s26
      %s28 = sshll.u32 [#allocation6], 4
      %s29 = int_to_ptr.vmem [resolvable:$true] %s28
      %34 = dma.hbm_to_vmem [thread:$0]  %s1, 512, %s29, [#allocation7], 128, 128, 8
    $region9: #{tpu_custom_call.1} parent=1 // pred_fallthru
      _
    // Predicated region
    $region10: #{tpu_custom_call.1} parent=1 // pred_check
      _
    $region11: #{tpu_custom_call.1} parent=1 // pred_check_branch
      %36 = sbr.rel (0) target = $region13
    $region12: #{tpu_custom_call.1} parent=1 // pred_region
      _
    $region13: #{tpu_custom_call.1} parent=1 // pred_fallthru
      _
    // Predicated region
    $region14: #{tpu_custom_call.1} parent=1 // pred_check
      _
    $region15: #{tpu_custom_call.1} parent=1 // pred_check_branch
      %38 = sbr.rel (0) target = $region17
    $region16: #{tpu_custom_call.1} parent=1 // pred_region
      %39 = dma.done [#allocation4], 256
    $region17: #{tpu_custom_call.1} parent=1 // pred_fallthru
      _
    // Predicated region
    $region18: #{tpu_custom_call.1} parent=1 // pred_check
      _
    $region19: #{tpu_custom_call.1} parent=1 // pred_check_branch
      %41 = sbr.rel (0) target = $region21
    $region20: #{tpu_custom_call.1} parent=1 // pred_region
      %42 = dma.done [#allocation7], 512
    $region21: #{tpu_custom_call.1} parent=1 // pred_fallthru
      _
    %p43 = scmp.eq.s32.totalorder 0, 0
    // Predicated region
    $region22: #{tpu_custom_call.1} parent=1 // pred_check
      %p44 = pneg %p43
    $region23: #{tpu_custom_call.1} parent=1 // pred_check_branch
      %46 = sbr.rel (%p44) target = $region25
    $region24: #{tpu_custom_call.1} parent=1 // pred_region
      %vm47 = vcmask 254976
      %48 = vst.msk [vmem:[#allocation2] sm:$0x3] %vm47, 0.0
    $region25: #{tpu_custom_call.1} parent=1 // pred_fallthru
      _
    %v49 = vld [vmem:[#allocation3] sm:$0xff]
    %v50 = vld [vmem:[#allocation3 + $0x8] sm:$0xff]
    %v51 = vld [vmem:[#allocation2] sm:$0x3]
    %vm52 = vcmask 261120
    %v53 = vsel %vm52, %v49, 0.0
    %v54 = vrot.slane %v53, 4
    %v55 = vadd.f32 %v53, %v54
    %v56 = vrot.slane %v55, 2
    %v57 = vadd.f32 %v55, %v56
    %v58 = vrot.slane %v57, 1
    %v59 = vadd.f32 %v57, %v58
    %v60 = vsel %vm52, %v50, 0.0
    %v61 = vrot.slane %v60, 4
    %v62 = vadd.f32 %v60, %v61
    %v63 = vrot.slane %v62, 2
    %v64 = vadd.f32 %v62, %v63
    %v65 = vrot.slane %v64, 1
    %v66 = vadd.f32 %v64, %v65
    %vm69 = vcmask 1041409
    %v70 = vsel %vm69, %v66, %v59
    %v72 = vadd.f32 %v51, %v70
    %vm73 = vcmask 254976
    %74 = vst.msk [vmem:[#allocation2] sm:$0x3] %vm73, %v72
    // Predicated region
    $region26: #{tpu_custom_call.1} parent=1 // pred_check
      %p75 = pneg %p43
    $region27: #{tpu_custom_call.1} parent=1 // pred_check_branch
      %77 = sbr.rel (%p75) target = $region29
    $region28: #{tpu_custom_call.1} parent=1 // pred_region
      %v78 = vld [vmem:[#allocation2] sm:$0x3]
      %v79 = vld [vmem:[#allocation6] sm:$0xff]
      %v80 = vld [vmem:[#allocation6 + $0x8] sm:$0xff]
      %v81 = vld [vmem:[#allocation6 + $0x10] sm:$0xff]
      %v82 = vld [vmem:[#allocation6 + $0x18] sm:$0xff]
      %v83 = vld [vmem:[%s2] sm:$0x1]
      %v84 = vmul.f32 %v83, 8.0
      %v86 = vlaneseq
      %v87 = vshrl.u32 %v86, 7
      %v88 = vsub.s32 0, %v87
      %v89 = vrot.slane %v84, %v88
      %v92 = vsel %vm52, %v78, 0
      %v95 = vsel %vm52, %v79, 0
      %v98 = vsel %vm52, %v80, 0
      %v101 = vsel %vm52, %v81, 0
      %v104 = vsel %vm52, %v82, 0
      %106 = vmatprep.subr.mxu0 0.0
      %107 = vmatpush1.xpose.msra.mxu0 %v95
      %108 = vmatprep.subr.mxu0 0.0
      %109 = vmatpush1.xpose.msra.mxu0 %v98
      %110 = vmatprep.subr.mxu0 0.0
      %111 = vmatpush1.xpose.msra.mxu0 %v101
      %112 = vmatprep.subr.mxu0 0.0
      %113 = vmatpush1.xpose.msra.mxu0 %v104
      %114 = vmatprep.subr.mxu0 0.0
      %115 = vmatpush1.xpose.msra.mxu0 0.0
      %116 = vmatprep.subr.mxu0 0.0
      %117 = vmatpush1.xpose.msra.mxu0 0.0
      %118 = vmatprep.subr.mxu0 0.0
      %119 = vmatpush1.xpose.msra.mxu0 0.0
      %120 = vmatprep.subr.mxu0 0.0
      %121 = vmatpush1.xpose.msra.mxu0 0.0
      %122 = vmatprep.subr.mxu0 0.0
      %123 = vmatpush1.xpose.msra.mxu0 0.0
      %124 = vmatprep.subr.mxu0 0.0
      %125 = vmatpush1.xpose.msra.mxu0 0.0
      %126 = vmatprep.subr.mxu0 0.0
      %127 = vmatpush1.xpose.msra.mxu0 0.0
      %128 = vmatprep.subr.mxu0 0.0
      %129 = vmatpush1.xpose.msra.mxu0 0.0
      %130 = vmatprep.subr.mxu0 0.0
      %131 = vmatpush1.xpose.msra.mxu0 0.0
      %132 = vmatprep.subr.mxu0 0.0
      %133 = vmatpush1.xpose.msra.mxu0 0.0
      %134 = vmatprep.subr.mxu0 0.0
      %135 = vmatpush1.xpose.msra.mxu0 0.0
      %136 = vmatprep.subr.mxu0 0.0
      %137 = vmatpush1.xpose.msra.mxu0 0.0
      %138 = vmatprep.subr.mxu0 0.0
      %139 = vmatpush1.xpose.msra.mxu0 0.0
      %140 = vmatprep.subr.mxu0 0.0
      %141 = vmatpush1.xpose.msra.mxu0 0.0
      %142 = vmatprep.subr.mxu0 0.0
      %143 = vmatpush1.xpose.msra.mxu0 0.0
      %144 = vmatprep.subr.mxu0 0.0
      %145 = vmatpush1.xpose.msra.mxu0 0.0
      %146 = vmatprep.subr.mxu0 0.0
      %147 = vmatpush1.xpose.msra.mxu0 0.0
      %148 = vmatprep.subr.mxu0 0.0
      %149 = vmatpush1.xpose.msra.mxu0 0.0
      %150 = vmatprep.subr.mxu0 0.0
      %151 = vmatpush1.xpose.msra.mxu0 0.0
      %152 = vmatprep.subr.mxu0 0.0
      %153 = vmatpush1.xpose.msra.mxu0 0.0
      %154 = vmatprep.subr.mxu0 0.0
      %155 = vmatpush1.xpose.msra.mxu0 0.0
      %156 = vmatprep.subr.mxu0 0.0
      %157 = vmatpush1.xpose.msra.mxu0 0.0
      %158 = vmatprep.subr.mxu0 0.0
      %159 = vmatpush1.xpose.msra.mxu0 0.0
      %160 = vmatprep.subr.mxu0 0.0
      %161 = vmatpush1.xpose.msra.mxu0 0.0
      %162 = vmatprep.subr.mxu0 0.0
      %163 = vmatpush1.xpose.msra.mxu0 0.0
      %164 = vmatprep.subr.mxu0 0.0
      %165 = vmatpush1.xpose.msra.mxu0 0.0
      %166 = vmatprep.subr.mxu0 0.0
      %167 = vmatpush1.xpose.msra.mxu0 0.0
      %168 = vmatprep.subr.mxu0 0.0
      %169 = vmatpush1.xpose.msra.mxu0 0.0
      %170 = vmatprep.mubr.f32.mxu0 0.0
      %171 = vmatmul.mubr.f32.gmra.mrb[0].mxu0 %v92
      %v172 = vpop.f32.mrb[0].mxu0
      %v173 = vadd.f32 %v89, %v172
      %v174 = vpop.f32.mrb[0].mxu0
      %175 = vdwg.mxu0
      %v176 = vmax.f32 %v173, 0.0
      %177 = vst.msk [vmem:[#allocation8] sm:$0x3] %vm73, %v176
    $region29: #{tpu_custom_call.1} parent=1 // pred_fallthru
      _
    // Predicated region
    $region30: #{tpu_custom_call.1} parent=1 // pred_check
      _
    $region31: #{tpu_custom_call.1} parent=1 // pred_check_branch
      %179 = sbr.rel (0) target = $region33
    $region32: #{tpu_custom_call.1} parent=1 // pred_region
      %s181 = ssub.s32 32, 32
      %182 = vsyncadd [#allocation5], %s181
      %s184 = sshll.u32 [#allocation8], 4
      %s185 = int_to_ptr.vmem [resolvable:$true] %s184
      %187 = dma.vmem_to_hbm [thread:$0]  %s185, 32, %s3, [#allocation5]
    $region33: #{tpu_custom_call.1} parent=1 // pred_fallthru
      _
    // Predicated region
    $region34: #{tpu_custom_call.1} parent=1 // pred_check
      _
    $region35: #{tpu_custom_call.1} parent=1 // pred_check_branch
      %189 = sbr.rel (0) target = $region37
    $region36: #{tpu_custom_call.1} parent=1 // pred_region
      %190 = dma.done [#allocation5], 32
    $region37: #{tpu_custom_call.1} parent=1 // pred_fallthru
      _
    %191 = vsyncpa [#allocation4], 1
    %192 = vsyncpa [#allocation7], 1
    %193 = vsyncpa [#allocation5], 1

</llo_original>
